<compile_context>
chip_gen: v7x
topology: tpu7x:2x2x1
jax: 0.10.0
libtpu: 0.0.40
codegen_flags: <defaults>
</compile_context>

<pallas_src>
import math

import jax
import jax.numpy as jnp
from jax.experimental import pallas as pl
from jax.experimental.pallas import tpu as pltpu


def _layer_scale_kernel(x_ref, w_ref, o_ref):
    # Pure VPU broadcast multiply on one (TM, inner) tile.
    o_ref[...] = x_ref[...] * w_ref[...]


def _row_tile(m_rows: int, lane_width: int, itemsize: int) -> int:
    """Row-tile size: ~2 MiB per x block, sublane-aligned for the dtype, <= m_rows."""
    sub_align = max(8, 32 // itemsize)      # 8 rows (f32), 16 (bf16), 32 (int8/fp8)
    target_bytes = 2 * 1024 * 1024          # 2x(x) + 2x(out) double-buffered ~= 8 MiB
    tm = target_bytes // max(1, lane_width * itemsize)
    tm = max(sub_align, (tm // sub_align) * sub_align)
    if tm >= m_rows:
        return m_rows                       # full extent is always a legal block dim
    return tm


def _scale_2d(x2: jax.Array, w2: jax.Array) -> jax.Array:
    """out2[r, c] = x2[r, c] * w2[broadcast], with w2 shape (1, inner) or (rows, 1)."""
    m_rows, inner = x2.shape
    itemsize = jnp.dtype(x2.dtype).itemsize
    tm = _row_tile(m_rows, inner, itemsize)

    if w2.shape[0] == 1:
        # channels_last: one resident (1, inner) weight row (same block every step).
        w_spec = pl.BlockSpec((1, inner), lambda i: (0, 0))
    else:
        # channels_first: per-row scale; only a (tm, 1) sliver per grid step.
        w_spec = pl.BlockSpec((tm, 1), lambda i: (i, 0))

    cost = pl.CostEstimate(
        flops=x2.size,
        transcendentals=0,
        bytes_accessed=2 * x2.size * itemsize + w2.size * itemsize,
    )

    return pl.pallas_call(
        _layer_scale_kernel,
        out_shape=jax.ShapeDtypeStruct(x2.shape, x2.dtype),
        grid=(pl.cdiv(m_rows, tm),),
        in_specs=[
            pl.BlockSpec((tm, inner), lambda i: (i, 0)),
            w_spec,
        ],
        out_specs=pl.BlockSpec((tm, inner), lambda i: (i, 0)),
        compiler_params=pltpu.CompilerParams(
            dimension_semantics=("parallel",),   # shard row blocks across TCs (v7x)
        ),
        cost_estimate=cost,
    )(x2, w2)


def layer_scale(x: jax.Array, weight: jax.Array, data_format: str = "channels_last") -> jax.Array:
    """Pallas implementation of LayerScale.forward (non-inplace; JAX is functional)."""
    assert data_format in ("channels_last", "channels_first")
    orig_shape = x.shape

    if data_format == "channels_last":
        dim = orig_shape[-1]
        assert weight.shape == (dim,)
        m = 1
        for s in orig_shape[:-1]:
            m *= s
        # Fold rows into the lane axis so the last dim becomes a multiple of 128
        # (lane-dense loads/stores instead of masked partial stores for small dim).
        k = 128 // math.gcd(dim, 128)
        if k > 1 and m % k == 0:
            x2 = x.reshape(m // k, k * dim)
            w2 = jnp.tile(weight, k).reshape(1, k * dim).astype(x.dtype)
        else:
            x2 = x.reshape(m, dim)
            w2 = weight.reshape(1, dim).astype(x.dtype)
        out2 = _scale_2d(x2, w2)
        return out2.reshape(orig_shape)

    # channels_first (e.g. NCHW): rows are (batch, channel), lanes are spatial.
    n, c = orig_shape[0], orig_shape[1]
    assert weight.shape == (c,)
    spatial = 1
    for s in orig_shape[2:]:
        spatial *= s
    x2 = x.reshape(n * c, spatial)
    w2 = jnp.broadcast_to(weight[None, :], (n, c)).reshape(n * c, 1).astype(x.dtype)
    out2 = _scale_2d(x2, w2)
    return out2.reshape(orig_shape)


if __name__ == "__main__":
    key = jax.random.PRNGKey(0)
    scale_init = 1e-5

    # ---- channels_first case: NCHW input, dim = C ----
    x_cf = jax.random.normal(key, (2, 4, 16, 16), dtype=jnp.float32)
    w_cf = jnp.ones((4,), dtype=jnp.float32) * scale_init
    out_cf = jax.block_until_ready(layer_scale(x_cf, w_cf, data_format="channels_first"))
    ref_cf = x_cf * w_cf.reshape(1, -1, 1, 1)

    # ---- channels_last case: NHWC-style input, small dim (lane folding, k=32) ----
    k2 = jax.random.PRNGKey(1)
    x_cl = jax.random.normal(k2, (2, 16, 16, 4), dtype=jnp.float32)
    w_cl = jnp.ones((4,), dtype=jnp.float32) * scale_init
    out_cl = jax.block_until_ready(layer_scale(x_cl, w_cl, data_format="channels_last"))
    ref_cl = x_cl * w_cl.reshape(1, 1, 1, -1)

    # ---- channels_last case: typical LayerScale dim=96 (k=4), exercises multi-step
    #      grid with a partial edge block ----
    k3 = jax.random.PRNGKey(2)
    x_big = jax.random.normal(k3, (2, 64, 64, 96), dtype=jnp.float32)
    w_big = (jnp.arange(96, dtype=jnp.float32) + 1.0) * scale_init
    out_big = jax.block_until_ready(layer_scale(x_big, w_big, data_format="channels_last"))
    ref_big = x_big * w_big.reshape(1, 1, 1, -1)

    assert out_cf.shape == x_cf.shape and out_cf.dtype == x_cf.dtype
    assert out_cl.shape == x_cl.shape and out_cl.dtype == x_cl.dtype
    assert out_big.shape == x_big.shape and out_big.dtype == x_big.dtype
    assert jnp.allclose(out_cf, ref_cf, atol=1e-7, rtol=1e-6)
    assert jnp.allclose(out_cl, ref_cl, atol=1e-7, rtol=1e-6)
    assert jnp.allclose(out_big, ref_big, atol=1e-7, rtol=1e-6)

    print("KERNEL_OK")
</pallas_src>

<mosaic_0001>
module attributes {stable_mosaic.version = 11 : i64} {
  func.func @_layer_scale_kernel(%arg0: i32, %arg1: memref<8x256xf32, #tpu.memory_space<vmem>>, %arg2: memref<8x1xf32, #tpu.memory_space<vmem>>, %arg3: memref<8x256xf32, #tpu.memory_space<vmem>>) attributes {dimension_semantics = [#tpu.dimension_semantics<parallel>], iteration_bounds = array<i64: 1>, scalar_prefetch = 0 : i64, scratch_operands = 0 : i64, tpu.core_type = #tpu.core_type<tc>, window_params = [{transform_indices = @transform_0, window_bounds = array<i64: 8, 256>}, {transform_indices = @transform_1, window_bounds = array<i64: 8, 1>}, {transform_indices = @transform_2, window_bounds = array<i64: 8, 256>}]} {
    %c0 = arith.constant 0 : index
    %c0_0 = arith.constant 0 : index
    %0 = vector.load %arg1[%c0, %c0_0] : memref<8x256xf32, #tpu.memory_space<vmem>>, vector<8x256xf32>
    %c0_1 = arith.constant 0 : index
    %c0_2 = arith.constant 0 : index
    %1 = vector.load %arg2[%c0_1, %c0_2] : memref<8x1xf32, #tpu.memory_space<vmem>>, vector<8x1xf32>
    %2 = vector.broadcast %1 : vector<8x1xf32> to vector<8x256xf32>
    %3 = arith.mulf %0, %2 : vector<8x256xf32>
    %c0_3 = arith.constant 0 : index
    %c0_4 = arith.constant 0 : index
    %4 = vector.load %arg3[%c0_3, %c0_4] : memref<8x256xf32, #tpu.memory_space<vmem>>, vector<8x256xf32>
    tpu.vector_store %arg3[%c0_3, %c0_4], %3 {strides = array<i32>} : memref<8x256xf32, #tpu.memory_space<vmem>>, vector<8x256xf32>,
    return
  }
  func.func @transform_0(%arg0: i32) -> (i32, i32) {
    %c0_i32 = arith.constant 0 : i32
    %c0_i32_0 = arith.constant 0 : i32
    return %arg0, %c0_i32 : i32, i32
  }
  func.func @transform_1(%arg0: i32) -> (i32, i32) {
    %c0_i32 = arith.constant 0 : i32
    %c0_i32_0 = arith.constant 0 : i32
    return %arg0, %c0_i32 : i32, i32
  }
  func.func @transform_2(%arg0: i32) -> (i32, i32) {
    %c0_i32 = arith.constant 0 : i32
    %c0_i32_0 = arith.constant 0 : i32
    return %arg0, %c0_i32 : i32, i32
  }
}

</mosaic_0001>

<llo_original>
// kernel: tpu_custom_call.1
$region0: #{tpu_custom_call.1}
  #allocation0 [shape = 'u32[]', space=smem, size = 0x4, offset = 0x4, fixed_abs, tag = 'smem constant byte address 0x4 - core index']
  #allocation1 [shape = 'u32[144,128]{1,0:T(1,128)}', space=vmem, size = 0x12000, scoped, tag = 'internal scratch']
  %s0 = inlined_call_operand.hbm [shape: f32[8,256], index: 0, kind: input, shape index: {}]
  %s1 = inlined_call_operand.vmem [shape: f32[8,1], index: 1, kind: input, shape index: {}]
  %s2 = inlined_call_operand.hbm [shape: f32[8,256], index: 2, kind: output, shape index: {}]
  %s3 = sld [smem:[#allocation0]]
  $region22: #{tpu_custom_call.1} parent=0
    _
  %s5 = ssub.s32 1, %s3
  %s6 = scalar_select 0, %s5, %s3
  $region1: #{tpu_custom_call.1} parent=0
    #allocation2 [shape = 'u8[8192]{0}', space=vmem, size = 0x2000, scoped, tag = 'input window, operand 0, single buffered']
    #allocation3 [shape = 's32[1]{0}', space=sflag, size = 0x4, scoped, tag = 'scoped memory for tpu_custom_call.1']
    #allocation4 [shape = 's32[1]{0}', space=sflag, size = 0x4, scoped, tag = 'scoped memory for tpu_custom_call.1']
    #allocation5 [shape = 'u8[8192]{0}', space=vmem, size = 0x2000, scoped, tag = 'output window, operand 0, single buffered']
    %7 = vsyncpa [#allocation3], 0
    %8 = vsyncpa [#allocation4], 0
    // Predicated region
    $region2: #{tpu_custom_call.1} parent=1 // pred_check
      _
    $region3: #{tpu_custom_call.1} parent=1 // pred_check_branch
      %10 = sbr.rel (0) target = $region5
    $region4: #{tpu_custom_call.1} parent=1 // pred_region
      %s12 = ssub.s32 256, 256
      %13 = vsyncadd [#allocation3], %s12
      %s15 = sshll.u32 [#allocation2], 4
      %s16 = int_to_ptr.vmem [resolvable:$true] %s15
      %18 = dma.hbm_to_vmem [thread:$0]  %s0, 256, %s16, [#allocation3]
    $region5: #{tpu_custom_call.1} parent=1 // pred_fallthru
      _
    // Predicated region
    $region6: #{tpu_custom_call.1} parent=1 // pred_check
      _
    $region7: #{tpu_custom_call.1} parent=1 // pred_check_branch
      %20 = sbr.rel (0) target = $region9
    $region8: #{tpu_custom_call.1} parent=1 // pred_region
      _
    $region9: #{tpu_custom_call.1} parent=1 // pred_fallthru
      _
    // Predicated region
    $region10: #{tpu_custom_call.1} parent=1 // pred_check
      _
    $region11: #{tpu_custom_call.1} parent=1 // pred_check_branch
      %22 = sbr.rel (0) target = $region13
    $region12: #{tpu_custom_call.1} parent=1 // pred_region
      %23 = dma.done [#allocation3], 256
    $region13: #{tpu_custom_call.1} parent=1 // pred_fallthru
      _
    %v24 = vld [vmem:[#allocation2] sm:$0xff]
    %v25 = vld [vmem:[#allocation2 + $0x8] sm:$0xff]
    %v26 = vld [vmem:[%s1] sm:$0xff]
    %28 = vset.pattern.permute.xlu0 0
    %29 = vperm.xlu0 %28, %v26
    %v30 = vpop.permute.xlu0 %29
    %v32 = vmul.f32 %v24, %v30
    %v33 = vmul.f32 %v25, %v30
    %34 = vst [vmem:[#allocation5] sm:$0xff] %v32
    %35 = vst [vmem:[#allocation5 + $0x8] sm:$0xff] %v33
    // Predicated region
    $region14: #{tpu_custom_call.1} parent=1 // pred_check
      _
    $region15: #{tpu_custom_call.1} parent=1 // pred_check_branch
      %37 = sbr.rel (0) target = $region17
    $region16: #{tpu_custom_call.1} parent=1 // pred_region
      %s39 = ssub.s32 256, 256
      %40 = vsyncadd [#allocation4], %s39
      %s42 = sshll.u32 [#allocation5], 4
      %s43 = int_to_ptr.vmem [resolvable:$true] %s42
      %45 = dma.vmem_to_hbm [thread:$0]  %s43, 256, %s2, [#allocation4]
    $region17: #{tpu_custom_call.1} parent=1 // pred_fallthru
      _
    // Predicated region
    $region18: #{tpu_custom_call.1} parent=1 // pred_check
      _
    $region19: #{tpu_custom_call.1} parent=1 // pred_check_branch
      %47 = sbr.rel (0) target = $region21
    $region20: #{tpu_custom_call.1} parent=1 // pred_region
      %48 = dma.done [#allocation4], 256
    $region21: #{tpu_custom_call.1} parent=1 // pred_fallthru
      _
    %49 = vsyncpa [#allocation3], 1
    %50 = vsyncpa [#allocation4], 1

</llo_original>
